<compile_context>
chip_gen: v6e
topology: v6e:2x2x1
jax: 0.10.0
libtpu: 0.0.40
codegen_flags: <defaults>
</compile_context>

<pallas_src>
import jax
import jax.numpy as jnp
from jax import lax
from jax.experimental import pallas as pl
from jax.experimental.pallas import tpu as pltpu


def _round_up(n, m):
    return (n + m - 1) // m * m


def _ffn_kernel_accumulate_out(x_ref, w1_ref, w2t_ref, o_ref):
    """f32-output variant: accumulate directly into the resident output tile.

    x_ref  : (tm, d_model)   token tile
    w1_ref : (tk, d_model)   chunk of linear1.weight (native nn.Linear layout)
    w2t_ref: (tk, d_model)   chunk of linear2.weight, pre-transposed to (dff, d_model)
    o_ref  : (tm, d_model)   f32 output tile, resident across the dff grid axis
    """
    k = pl.program_id(1)

    # h = relu(x @ w1_chunk.T): contract d_model (lane dim of both operands).
    h = lax.dot_general(
        x_ref[...], w1_ref[...],
        dimension_numbers=(((1,), (1,)), ((), ())),
        preferred_element_type=jnp.float32)
    h = jnp.maximum(h, 0.0)

    # TODO(synk): expert_dropout > 0 (training-mode dropout) not implemented;
    # module default expert_dropout=0.0, so forward semantics are exact.

    # contrib = h @ w2t_chunk : canonical (m,k)x(k,n) contraction, f32 accumulation.
    contrib = lax.dot_general(
        h.astype(w2t_ref.dtype), w2t_ref[...],
        dimension_numbers=(((1,), (0,)), ((), ())),
        preferred_element_type=jnp.float32)

    @pl.when(k == 0)
    def _():
        o_ref[...] = contrib

    @pl.when(k > 0)
    def _():
        o_ref[...] += contrib


def _ffn_kernel_scratch_acc(x_ref, w1_ref, w2t_ref, o_ref, acc_ref):
    """Generic-output variant: f32 scratch accumulator, cast on the last dff chunk."""
    k = pl.program_id(1)

    h = lax.dot_general(
        x_ref[...], w1_ref[...],
        dimension_numbers=(((1,), (1,)), ((), ())),
        preferred_element_type=jnp.float32)
    h = jnp.maximum(h, 0.0)

    contrib = lax.dot_general(
        h.astype(w2t_ref.dtype), w2t_ref[...],
        dimension_numbers=(((1,), (0,)), ((), ())),
        preferred_element_type=jnp.float32)

    @pl.when(k == 0)
    def _():
        acc_ref[...] = contrib

    @pl.when(k > 0)
    def _():
        acc_ref[...] += contrib

    @pl.when(k == pl.num_programs(1) - 1)
    def _():
        o_ref[...] = acc_ref[...].astype(o_ref.dtype)


def prepare_ffn_expert_weights(w1, w2):
    """One-time weight prep (init time, not per call).

    w1: [dff, d_model]  linear1.weight -- kept in native layout (contiguous-row chunks).
    w2: [d_model, dff]  linear2.weight -- transposed once to (dff, d_model) so its
        per-step chunks are contiguous rows and the second matmul is (m,k)x(k,n).
    """
    return jnp.asarray(w1), jnp.asarray(w2).T


def ffn_expert_forward(x, w1, w2t, *, tile_tokens=None, tile_dff=None, out_dtype=None):
    """FFNExpert forward: relu(x @ w1.T) @ w2 (no bias, dropout=0).

    x  : [..., d_model]
    w1 : [dff, d_model]  (linear1.weight, native nn.Linear layout)
    w2t: [dff, d_model]  (linear2.weight, pre-transposed by prepare_ffn_expert_weights)
    """
    d_model = x.shape[-1]
    dff = w1.shape[0]
    assert w1.shape == (dff, d_model), w1.shape
    assert w2t.shape == (dff, d_model), w2t.shape
    if out_dtype is None:
        out_dtype = x.dtype
    f32_out = jnp.dtype(out_dtype) == jnp.dtype(jnp.float32)

    lead_shape = x.shape[:-1]
    x2d = x.reshape(-1, d_model)
    T = x2d.shape[0]

    itemsize_x = jnp.dtype(x2d.dtype).itemsize
    itemsize_w = jnp.dtype(w1.dtype).itemsize
    itemsize_o = jnp.dtype(out_dtype).itemsize

    # ---- Generation-aware VMEM budget -------------------------------------
    try:
        vmem_cap = int(pltpu.get_tpu_info().vmem_capacity_bytes)
    except Exception:
        vmem_cap = 64 << 20  # conservative fallback (v7x-sized)
    small_vmem = vmem_cap <= (64 << 20)      # v7x-like: 64 MiB/TC, 2 TCs/chip
    vmem_ceiling = int(vmem_cap * 0.85)      # leave headroom for Mosaic scratch
    budget = vmem_ceiling - (4 << 20)

    # ---- Lane alignment (exact zero-padding) -------------------------------
    d_model_p = _round_up(d_model, 128)
    dff_p = _round_up(dff, 128)

    # ---- Token tile (sublane-aligned, roofline-aware) ----------------------
    if tile_tokens is None:
        if small_vmem:
            tile_tokens = 512                      # already compute-bound on v7x
        else:
            tile_tokens = 1024 if itemsize_w <= 2 else 1536   # v5e/v6e crossover
    tm = min(_round_up(tile_tokens, 8), _round_up(max(T, 8), 8))

    # v7x megacore: if all tokens land in one tile, split so both TCs get work.
    if small_vmem and T >= 512 and _round_up(T, 8) <= tm:
        tm = _round_up(-(-T // 2), 8)

    # ---- dff chunk (pad dff up instead of shrinking tk) --------------------
    if tile_dff is None:
        tile_dff = 512 if small_vmem else 1024
    tk = max(128, min(_round_up(tile_dff, 128), dff_p))

    # ---- Shrink-to-fit against the VMEM budget -----------------------------
    def _footprint(tm_, tk_):
        acc_bytes = 0 if f32_out else tm_ * d_model_p * 4
        return (2 * tm_ * d_model_p * itemsize_x      # x tile (double-buffered)
                + 2 * tk_ * d_model_p * itemsize_w    # w1 chunk (double-buffered)
                + 2 * tk_ * d_model_p * itemsize_w    # w2t chunk (double-buffered)
                + 2 * tm_ * d_model_p * itemsize_o    # out tile (double-buffered)
                + acc_bytes                           # f32 accumulator (non-f32 out)
                + 2 * tm_ * tk_ * 4)                  # (tm, tk) f32 intermediate + relu/cast

    min_tm = min(tm, 256)
    while _footprint(tm, tk) > budget and tm > min_tm:
        tm = max(min_tm, _round_up(tm // 2, 8))
    while _footprint(tm, tk) > budget and tk > 128:
        tk = max(128, (tk // 2) // 128 * 128)

    dff_pad = _round_up(dff_p, tk)
    pad_t = (-T) % tm
    Tp = T + pad_t

    # ---- Apply exact zero-padding ------------------------------------------
    if d_model_p != d_model:
        x2d = jnp.pad(x2d, ((0, 0), (0, d_model_p - d_model)))
    if pad_t:
        x2d = jnp.pad(x2d, ((0, pad_t), (0, 0)))
    if dff_pad != dff or d_model_p != d_model:
        w1 = jnp.pad(w1, ((0, dff_pad - dff), (0, d_model_p - d_model)))
        w2t = jnp.pad(w2t, ((0, dff_pad - dff), (0, d_model_p - d_model)))

    grid = (Tp // tm, dff_pad // tk)
    n_token_tiles = grid[0]

    needed = _footprint(tm, tk)
    vmem_limit = int(max(32 << 20, min(vmem_ceiling, needed * 1.4 + (8 << 20))))

    # Advisory cost estimate so XLA can overlap surrounding ops with the kernel.
    flops = 4 * Tp * dff_pad * d_model_p
    bytes_accessed = int(Tp * d_model_p * (itemsize_x + itemsize_o)
                         + 2 * n_token_tiles * dff_pad * d_model_p * itemsize_w)
    cost = pl.CostEstimate(flops=flops, transcendentals=0,
                           bytes_accessed=bytes_accessed)

    if f32_out:
        kernel = _ffn_kernel_accumulate_out
        scratch_shapes = []
    else:
        kernel = _ffn_kernel_scratch_acc
        scratch_shapes = [pltpu.VMEM((tm, d_model_p), jnp.float32)]

    out = pl.pallas_call(
        kernel,
        out_shape=jax.ShapeDtypeStruct((Tp, d_model_p), out_dtype),
        grid_spec=pltpu.PrefetchScalarGridSpec(
            num_scalar_prefetch=0,
            grid=grid,
            in_specs=[
                pl.BlockSpec((tm, d_model_p), lambda i, k: (i, 0)),   # x tile
                pl.BlockSpec((tk, d_model_p), lambda i, k: (k, 0)),   # w1 chunk (contig rows)
                pl.BlockSpec((tk, d_model_p), lambda i, k: (k, 0)),   # w2t chunk (contig rows)
            ],
            out_specs=pl.BlockSpec((tm, d_model_p), lambda i, k: (i, 0)),
            scratch_shapes=scratch_shapes,
        ),
        compiler_params=pltpu.CompilerParams(
            dimension_semantics=("parallel", "arbitrary"),
            vmem_limit_bytes=vmem_limit,
        ),
        cost_estimate=cost,
    )(x2d, w1, w2t)

    out = out[:T, :d_model]
    return out.reshape(*lead_shape, d_model)


if __name__ == "__main__":
    # Module config: FFNExpert(d_model=32, dim_feedforward=64, mp_size=1)
    d_model = 32
    dim_feedforward = 64
    batch, seq = 2, 8  # input x: [batch, seq, d_model]

    key = jax.random.PRNGKey(0)
    kx, k1, k2 = jax.random.split(key, 3)

    x = jax.random.normal(kx, (batch, seq, d_model), dtype=jnp.float32)
    # nn.Linear(in, out, bias=False) layouts:
    # linear1.weight: (dim_feedforward, d_model); linear2.weight: (d_model, dim_feedforward)
    w1 = jax.random.normal(k1, (dim_feedforward, d_model), dtype=jnp.float32) * 0.05
    w2 = jax.random.normal(k2, (d_model, dim_feedforward), dtype=jnp.float32) * 0.05

    # One-time weight prep (init time, NOT per forward call).
    w1p, w2t = prepare_ffn_expert_weights(w1, w2)

    y = jax.jit(ffn_expert_forward)(x, w1p, w2t)
    jax.block_until_ready(y)

    # Reference check in plain JAX (same math as the PyTorch forward).
    ref = jnp.maximum(x.astype(jnp.float32) @ w1.T, 0.0) @ w2.T
    assert y.shape == (batch, seq, d_model), y.shape
    assert jnp.allclose(y, ref, atol=1e-5, rtol=1e-5), "mismatch vs reference"

    print("KERNEL_OK")
</pallas_src>

<mosaic_0001>
module attributes {stable_mosaic.version = 11 : i64} {
  func.func @_ffn_kernel_accumulate_out(%arg0: i32, %arg1: i32, %arg2: memref<16x128xf32, #tpu.memory_space<vmem>>, %arg3: memref<128x128xf32, #tpu.memory_space<vmem>>, %arg4: memref<128x128xf32, #tpu.memory_space<vmem>>, %arg5: memref<16x128xf32, #tpu.memory_space<vmem>>) attributes {dimension_semantics = [#tpu.dimension_semantics<parallel>, #tpu.dimension_semantics<arbitrary>], iteration_bounds = array<i64: 1, 1>, scalar_prefetch = 0 : i64, scratch_operands = 0 : i64, tpu.core_type = #tpu.core_type<tc>, window_params = [{transform_indices = @transform_0, window_bounds = array<i64: 16, 128>}, {transform_indices = @transform_1, window_bounds = array<i64: 128, 128>}, {transform_indices = @transform_2, window_bounds = array<i64: 128, 128>}, {transform_indices = @transform_3, window_bounds = array<i64: 16, 128>}]} {
    %c0 = arith.constant 0 : index
    %c0_0 = arith.constant 0 : index
    %0 = vector.load %arg2[%c0, %c0_0] : memref<16x128xf32, #tpu.memory_space<vmem>>, vector<16x128xf32>
    %c0_1 = arith.constant 0 : index
    %c0_2 = arith.constant 0 : index
    %1 = vector.load %arg3[%c0_1, %c0_2] : memref<128x128xf32, #tpu.memory_space<vmem>>, vector<128x128xf32>
    %cst = arith.constant dense<0.000000e+00> : vector<16x128xf32>
    %2 = tpu.matmul %0, %1, %cst {dimension_numbers = #tpu.dot_dimension_numbers<[1], [1], [0], [0], [0, 0, 1, 0], [], []>} : vector<16x128xf32>, vector<128x128xf32>, vector<16x128xf32> -> vector<16x128xf32>
    %cst_3 = arith.constant 0.000000e+00 : f32
    %3 = vector.broadcast %cst_3 : f32 to vector<16x128xf32>
    %4 = arith.maximumf %2, %3 : vector<16x128xf32>
    %c0_4 = arith.constant 0 : index
    %c0_5 = arith.constant 0 : index
    %5 = vector.load %arg4[%c0_4, %c0_5] : memref<128x128xf32, #tpu.memory_space<vmem>>, vector<128x128xf32>
    %cst_6 = arith.constant dense<0.000000e+00> : vector<16x128xf32>
    %6 = tpu.matmul %4, %5, %cst_6 {dimension_numbers = #tpu.dot_dimension_numbers<[1], [0], [0], [1], [0, 0, 1, 1], [], []>} : vector<16x128xf32>, vector<128x128xf32>, vector<16x128xf32> -> vector<16x128xf32>
    %c0_i32 = arith.constant 0 : i32
    %7 = arith.cmpi eq, %arg1, %c0_i32 : i32
    %8 = arith.extui %7 : i1 to i32
    %c0_i32_7 = arith.constant 0 : i32
    %9 = arith.cmpi ne, %8, %c0_i32_7 : i32
    scf.if %9 {
      %c0_10 = arith.constant 0 : index
      %c0_11 = arith.constant 0 : index
      %13 = vector.load %arg5[%c0_10, %c0_11] : memref<16x128xf32, #tpu.memory_space<vmem>>, vector<16x128xf32>
      tpu.vector_store %arg5[%c0_10, %c0_11], %6 {strides = array<i32>} : memref<16x128xf32, #tpu.memory_space<vmem>>, vector<16x128xf32>,
    } else {
    }
    %c0_i32_8 = arith.constant 0 : i32
    %10 = arith.cmpi sgt, %arg1, %c0_i32_8 : i32
    %11 = arith.extui %10 : i1 to i32
    %c0_i32_9 = arith.constant 0 : i32
    %12 = arith.cmpi ne, %11, %c0_i32_9 : i32
    scf.if %12 {
      %c0_10 = arith.constant 0 : index
      %c0_11 = arith.constant 0 : index
      %13 = vector.load %arg5[%c0_10, %c0_11] : memref<16x128xf32, #tpu.memory_space<vmem>>, vector<16x128xf32>
      %14 = arith.addf %13, %6 : vector<16x128xf32>
      %c0_12 = arith.constant 0 : index
      %c0_13 = arith.constant 0 : index
      %15 = vector.load %arg5[%c0_12, %c0_13] : memref<16x128xf32, #tpu.memory_space<vmem>>, vector<16x128xf32>
      tpu.vector_store %arg5[%c0_12, %c0_13], %14 {strides = array<i32>} : memref<16x128xf32, #tpu.memory_space<vmem>>, vector<16x128xf32>,
    } else {
    }
    return
  }
  func.func @transform_0(%arg0: i32, %arg1: i32) -> (i32, i32) {
    %c0_i32 = arith.constant 0 : i32
    %c0_i32_0 = arith.constant 0 : i32
    return %arg0, %c0_i32 : i32, i32
  }
  func.func @transform_1(%arg0: i32, %arg1: i32) -> (i32, i32) {
    %c0_i32 = arith.constant 0 : i32
    %c0_i32_0 = arith.constant 0 : i32
    return %arg1, %c0_i32 : i32, i32
  }
  func.func @transform_2(%arg0: i32, %arg1: i32) -> (i32, i32) {
    %c0_i32 = arith.constant 0 : i32
    %c0_i32_0 = arith.constant 0 : i32
    return %arg1, %c0_i32 : i32, i32
  }
  func.func @transform_3(%arg0: i32, %arg1: i32) -> (i32, i32) {
    %c0_i32 = arith.constant 0 : i32
    %c0_i32_0 = arith.constant 0 : i32
    return %arg0, %c0_i32 : i32, i32
  }
}

</mosaic_0001>

<llo_original>
// kernel: ffn_expert_forward.1
$region0: #{ffn_expert_forward.1}
  #allocation0 [shape = 'u32[]', space=smem, size = 0x4, offset = 0x4, fixed_abs, tag = 'smem constant byte address 0x4 - core index']
  #allocation1 [shape = 'u32[144,128]{1,0:T(1,128)}', space=vmem, size = 0x12000, scoped, tag = 'internal scratch']
  %s0 = inlined_call_operand.vmem [shape: f32[16,128], index: 0, kind: input, shape index: {}]
  %s1 = inlined_call_operand.vmem [shape: f32[128,128], index: 1, kind: input, shape index: {}]
  %s2 = inlined_call_operand.vmem [shape: f32[128,128], index: 2, kind: input, shape index: {}]
  %s3 = inlined_call_operand.vmem [shape: f32[16,128], index: 3, kind: output, shape index: {}]
  %s4 = sld [smem:[#allocation0]]
  $region30: #{ffn_expert_forward.1} parent=0
    _
  %s6 = ssub.s32 1, %s4
  %s7 = scalar_select 0, %s6, %s4
  // Predicated region
  $region2: #{ffn_expert_forward.1} parent=0 // pred_check
    _
  $region3: #{ffn_expert_forward.1} parent=0 // pred_check_branch
    %9 = sbr.rel (0) target = $region5
  $region4: #{ffn_expert_forward.1} parent=0 // pred_region
    _
  $region5: #{ffn_expert_forward.1} parent=0 // pred_fallthru
    _
  // Predicated region
  $region6: #{ffn_expert_forward.1} parent=0 // pred_check
    _
  $region7: #{ffn_expert_forward.1} parent=0 // pred_check_branch
    %11 = sbr.rel (0) target = $region9
  $region8: #{ffn_expert_forward.1} parent=0 // pred_region
    _
  $region9: #{ffn_expert_forward.1} parent=0 // pred_fallthru
    _
  // Predicated region
  $region10: #{ffn_expert_forward.1} parent=0 // pred_check
    _
  $region11: #{ffn_expert_forward.1} parent=0 // pred_check_branch
    %13 = sbr.rel (0) target = $region13
  $region12: #{ffn_expert_forward.1} parent=0 // pred_region
    _
  $region13: #{ffn_expert_forward.1} parent=0 // pred_fallthru
    _
  %v14 = vld [vmem:[%s0] sm:$0xff]
  %v15 = vld [vmem:[%s0 + $0x8] sm:$0xff]
  %v16 = vld [vmem:[%s1] sm:$0xff]
  %v17 = vld [vmem:[%s1 + $0x8] sm:$0xff]
  %v18 = vld [vmem:[%s1 + $0x10] sm:$0xff]
  %v19 = vld [vmem:[%s1 + $0x18] sm:$0xff]
  %v20 = vld [vmem:[%s1 + $0x20] sm:$0xff]
  %v21 = vld [vmem:[%s1 + $0x28] sm:$0xff]
  %v22 = vld [vmem:[%s1 + $0x30] sm:$0xff]
  %v23 = vld [vmem:[%s1 + $0x38] sm:$0xff]
  %v24 = vld [vmem:[%s1 + $0x40] sm:$0xff]
  %v25 = vld [vmem:[%s1 + $0x48] sm:$0xff]
  %v26 = vld [vmem:[%s1 + $0x50] sm:$0xff]
  %v27 = vld [vmem:[%s1 + $0x58] sm:$0xff]
  %v28 = vld [vmem:[%s1 + $0x60] sm:$0xff]
  %v29 = vld [vmem:[%s1 + $0x68] sm:$0xff]
  %v30 = vld [vmem:[%s1 + $0x70] sm:$0xff]
  %v31 = vld [vmem:[%s1 + $0x78] sm:$0xff]
  %32 = vmatprep.subr.mxu0 0.0
  %33 = vmatpush1.xpose.msra.mxu0 %v31
  %34 = vmatprep.subr.mxu0 0.0
  %35 = vmatpush1.xpose.msra.mxu0 %v30
  %36 = vmatprep.subr.mxu0 0.0
  %37 = vmatpush1.xpose.msra.mxu0 %v29
  %38 = vmatprep.subr.mxu0 0.0
  %39 = vmatpush1.xpose.msra.mxu0 %v28
  %40 = vmatprep.subr.mxu0 0.0
  %41 = vmatpush1.xpose.msra.mxu0 %v27
  %42 = vmatprep.subr.mxu0 0.0
  %43 = vmatpush1.xpose.msra.mxu0 %v26
  %44 = vmatprep.subr.mxu0 0.0
  %45 = vmatpush1.xpose.msra.mxu0 %v25
  %46 = vmatprep.subr.mxu0 0.0
  %47 = vmatpush1.xpose.msra.mxu0 %v24
  %48 = vmatprep.subr.mxu0 0.0
  %49 = vmatpush1.xpose.msra.mxu0 %v23
  %50 = vmatprep.subr.mxu0 0.0
  %51 = vmatpush1.xpose.msra.mxu0 %v22
  %52 = vmatprep.subr.mxu0 0.0
  %53 = vmatpush1.xpose.msra.mxu0 %v21
  %54 = vmatprep.subr.mxu0 0.0
  %55 = vmatpush1.xpose.msra.mxu0 %v20
  %56 = vmatprep.subr.mxu0 0.0
  %57 = vmatpush1.xpose.msra.mxu0 %v19
  %58 = vmatprep.subr.mxu0 0.0
  %59 = vmatpush1.xpose.msra.mxu0 %v18
  %60 = vmatprep.subr.mxu0 0.0
  %61 = vmatpush1.xpose.msra.mxu0 %v17
  %62 = vmatprep.subr.mxu0 0.0
  %63 = vmatpush1.xpose.msra.mxu0 %v16
  %64 = vmatprep.subr.mxu0 0.0
  %65 = vmatpush2.xpose.msra.mxu0 0.0
  %66 = vmatprep.subr.mxu0 0.0
  %67 = vmatpush2.xpose.msra.mxu0 0.0
  %68 = vmatprep.subr.mxu0 0.0
  %69 = vmatpush2.xpose.msra.mxu0 0.0
  %70 = vmatprep.subr.mxu0 0.0
  %71 = vmatpush2.xpose.msra.mxu0 0.0
  %72 = vmatprep.subr.mxu0 0.0
  %73 = vmatpush2.xpose.msra.mxu0 0.0
  %74 = vmatprep.subr.mxu0 0.0
  %75 = vmatpush2.xpose.msra.mxu0 0.0
  %76 = vmatprep.subr.mxu0 0.0
  %77 = vmatpush2.xpose.msra.mxu0 0.0
  %78 = vmatprep.subr.mxu0 0.0
  %79 = vmatpush2.xpose.msra.mxu0 0.0
  %80 = vmatprep.subr.mxu0 0.0
  %81 = vmatpush2.xpose.msra.mxu0 0.0
  %82 = vmatprep.subr.mxu0 0.0
  %83 = vmatpush2.xpose.msra.mxu0 0.0
  %84 = vmatprep.subr.mxu0 0.0
  %85 = vmatpush2.xpose.msra.mxu0 0.0
  %86 = vmatprep.subr.mxu0 0.0
  %87 = vmatpush2.xpose.msra.mxu0 0.0
  %88 = vmatprep.subr.mxu0 0.0
  %89 = vmatpush2.xpose.msra.mxu0 0.0
  %90 = vmatprep.subr.mxu0 0.0
  %91 = vmatpush2.xpose.msra.mxu0 0.0
  %92 = vmatprep.subr.mxu0 0.0
  %93 = vmatpush2.xpose.msra.mxu0 0.0
  %94 = vmatprep.subr.mxu0 0.0
  %95 = vmatpush2.xpose.msra.mxu0 0.0
  %96 = vmatprep.mubr.f32.mxu0 0.0
  %97 = vmatmul.mubr.f32.gmra.mxu0 %v14
  %v98 = vpop.f32.mrf.mxu0
  %v99 = vadd.f32 0.0, %v98
  %v100 = vpop.f32.mrf.mxu0
  %101 = vmatprep.mubr.f32.mxu0 0.0
  %102 = vmatmul.mubr.f32.gmra.mxu0 %v15
  %v103 = vpop.f32.mrf.mxu0
  %v104 = vadd.f32 0.0, %v103
  %v105 = vpop.f32.mrf.mxu0
  %106 = vdwg.mxu0
  %v107 = vmax.f32 %v99, 0.0
  %v108 = vmax.f32 %v104, 0.0
  %v109 = vld [vmem:[%s2] sm:$0xff]
  %v110 = vld [vmem:[%s2 + $0x8] sm:$0xff]
  %v111 = vld [vmem:[%s2 + $0x10] sm:$0xff]
  %v112 = vld [vmem:[%s2 + $0x18] sm:$0xff]
  %v113 = vld [vmem:[%s2 + $0x20] sm:$0xff]
  %v114 = vld [vmem:[%s2 + $0x28] sm:$0xff]
  %v115 = vld [vmem:[%s2 + $0x30] sm:$0xff]
  %v116 = vld [vmem:[%s2 + $0x38] sm:$0xff]
  %v117 = vld [vmem:[%s2 + $0x40] sm:$0xff]
  %v118 = vld [vmem:[%s2 + $0x48] sm:$0xff]
  %v119 = vld [vmem:[%s2 + $0x50] sm:$0xff]
  %v120 = vld [vmem:[%s2 + $0x58] sm:$0xff]
  %v121 = vld [vmem:[%s2 + $0x60] sm:$0xff]
  %v122 = vld [vmem:[%s2 + $0x68] sm:$0xff]
  %v123 = vld [vmem:[%s2 + $0x70] sm:$0xff]
  %v124 = vld [vmem:[%s2 + $0x78] sm:$0xff]
  %125 = vmatprep.subr.mxu0 0.0
  %126 = vmatpush1.msra.mxu0 %v124
  %127 = vmatprep.subr.mxu0 0.0
  %128 = vmatpush1.msra.mxu0 %v123
  %129 = vmatprep.subr.mxu0 0.0
  %130 = vmatpush1.msra.mxu0 %v122
  %131 = vmatprep.subr.mxu0 0.0
  %132 = vmatpush1.msra.mxu0 %v121
  %133 = vmatprep.subr.mxu0 0.0
  %134 = vmatpush1.msra.mxu0 %v120
  %135 = vmatprep.subr.mxu0 0.0
  %136 = vmatpush1.msra.mxu0 %v119
  %137 = vmatprep.subr.mxu0 0.0
  %138 = vmatpush1.msra.mxu0 %v118
  %139 = vmatprep.subr.mxu0 0.0
  %140 = vmatpush1.msra.mxu0 %v117
  %141 = vmatprep.subr.mxu0 0.0
  %142 = vmatpush1.msra.mxu0 %v116
  %143 = vmatprep.subr.mxu0 0.0
  %144 = vmatpush1.msra.mxu0 %v115
  %145 = vmatprep.subr.mxu0 0.0
  %146 = vmatpush1.msra.mxu0 %v114
  %147 = vmatprep.subr.mxu0 0.0
  %148 = vmatpush1.msra.mxu0 %v113
  %149 = vmatprep.subr.mxu0 0.0
  %150 = vmatpush1.msra.mxu0 %v112
  %151 = vmatprep.subr.mxu0 0.0
  %152 = vmatpush1.msra.mxu0 %v111
  %153 = vmatprep.subr.mxu0 0.0
  %154 = vmatpush1.msra.mxu0 %v110
  %155 = vmatprep.subr.mxu0 0.0
  %156 = vmatpush1.msra.mxu0 %v109
  %157 = vmatprep.subr.mxu0 0.0
  %158 = vmatpush2.msra.mxu0 0.0
  %159 = vmatprep.subr.mxu0 0.0
  %160 = vmatpush2.msra.mxu0 0.0
  %161 = vmatprep.subr.mxu0 0.0
  %162 = vmatpush2.msra.mxu0 0.0
  %163 = vmatprep.subr.mxu0 0.0
  %164 = vmatpush2.msra.mxu0 0.0
  %165 = vmatprep.subr.mxu0 0.0
  %166 = vmatpush2.msra.mxu0 0.0
  %167 = vmatprep.subr.mxu0 0.0
  %168 = vmatpush2.msra.mxu0 0.0
  %169 = vmatprep.subr.mxu0 0.0
  %170 = vmatpush2.msra.mxu0 0.0
  %171 = vmatprep.subr.mxu0 0.0
  %172 = vmatpush2.msra.mxu0 0.0
  %173 = vmatprep.subr.mxu0 0.0
  %174 = vmatpush2.msra.mxu0 0.0
  %175 = vmatprep.subr.mxu0 0.0
  %176 = vmatpush2.msra.mxu0 0.0
  %177 = vmatprep.subr.mxu0 0.0
  %178 = vmatpush2.msra.mxu0 0.0
  %179 = vmatprep.subr.mxu0 0.0
  %180 = vmatpush2.msra.mxu0 0.0
  %181 = vmatprep.subr.mxu0 0.0
  %182 = vmatpush2.msra.mxu0 0.0
  %183 = vmatprep.subr.mxu0 0.0
  %184 = vmatpush2.msra.mxu0 0.0
  %185 = vmatprep.subr.mxu0 0.0
  %186 = vmatpush2.msra.mxu0 0.0
  %187 = vmatprep.subr.mxu0 0.0
  %188 = vmatpush2.msra.mxu0 0.0
  %189 = vmatprep.mubr.f32.mxu0 0.0
  %190 = vmatmul.mubr.f32.gmra.mxu0 %v107
  %v191 = vpop.f32.mrf.mxu0
  %v192 = vadd.f32 0.0, %v191
  %v193 = vpop.f32.mrf.mxu0
  %194 = vmatprep.mubr.f32.mxu0 0.0
  %195 = vmatmul.mubr.f32.gmra.mxu0 %v108
  %v196 = vpop.f32.mrf.mxu0
  %v197 = vadd.f32 0.0, %v196
  %v198 = vpop.f32.mrf.mxu0
  %199 = vdwg.mxu0
  %p200 = scmp.eq.s32.totalorder 0, 0
  // Predicated region
  $region14: #{ffn_expert_forward.1} parent=0 // pred_check
    %p201 = pneg %p200
  $region15: #{ffn_expert_forward.1} parent=0 // pred_check_branch
    %203 = sbr.rel (%p201) target = $region17
  $region16: #{ffn_expert_forward.1} parent=0 // pred_region
    %204 = vst [vmem:[%s3] sm:$0xff] %v192
    %205 = vst [vmem:[%s3 + $0x8] sm:$0xff] %v197
  $region17: #{ffn_expert_forward.1} parent=0 // pred_fallthru
    _
  %p206 = scmp.gt.s32.totalorder 0, 0
  // Predicated region
  $region18: #{ffn_expert_forward.1} parent=0 // pred_check
    %p207 = pneg %p206
  $region19: #{ffn_expert_forward.1} parent=0 // pred_check_branch
    %209 = sbr.rel (%p207) target = $region21
  $region20: #{ffn_expert_forward.1} parent=0 // pred_region
    %v210 = vld [vmem:[%s3] sm:$0xff]
    %v211 = vld [vmem:[%s3 + $0x8] sm:$0xff]
    %v212 = vadd.f32 %v210, %v192
    %v213 = vadd.f32 %v211, %v197
    %214 = vst [vmem:[%s3] sm:$0xff] %v212
    %215 = vst [vmem:[%s3 + $0x8] sm:$0xff] %v213
  $region21: #{ffn_expert_forward.1} parent=0 // pred_fallthru
    _
  // Predicated region
  $region22: #{ffn_expert_forward.1} parent=0 // pred_check
    _
  $region23: #{ffn_expert_forward.1} parent=0 // pred_check_branch
    %217 = sbr.rel (0) target = $region25
  $region24: #{ffn_expert_forward.1} parent=0 // pred_region
    _
  $region25: #{ffn_expert_forward.1} parent=0 // pred_fallthru
    _
  // Predicated region
  $region26: #{ffn_expert_forward.1} parent=0 // pred_check
    _
  $region27: #{ffn_expert_forward.1} parent=0 // pred_check_branch
    %219 = sbr.rel (0) target = $region29
  $region28: #{ffn_expert_forward.1} parent=0 // pred_region
    _
  $region29: #{ffn_expert_forward.1} parent=0 // pred_fallthru
    _

</llo_original>
